<compile_context>
chip_gen: v7x
topology: tpu7x:2x2x1
jax: 0.10.0
libtpu: 0.0.40
codegen_flags: <defaults>
</compile_context>

<pallas_src>
import jax
import jax.numpy as jnp
from jax.experimental import pallas as pl
from jax.experimental.pallas import tpu as pltpu

# pysot default training weights (cfg.TRAIN.CLS_WEIGHT / cfg.TRAIN.LOC_WEIGHT)
CLS_WEIGHT = 1.0
LOC_WEIGHT = 1.2

LANES = 128  # lane-dense last dim


def _round_up(x, m):
    return (x + m - 1) // m * m


def _pad_last(x, n, val):
    pad = n - x.shape[-1]
    if pad == 0:
        return x
    widths = [(0, 0)] * (x.ndim - 1) + [(0, pad)]
    return jnp.pad(x, widths, constant_values=val)


def _vmem_capacity_bytes():
    try:
        return int(pltpu.get_tpu_info().vmem_capacity_bytes)
    except Exception:
        return 64 * 1024 * 1024  # conservative fallback (v7x per-TC VMEM)


def _tile_plan(B, rows_b, rows_target):
    """Choose (bt, row_tile, num_b_tiles, num_row_tiles, rows_b_pad)."""
    rows_b8 = _round_up(max(rows_b, 1), 8)
    if rows_b8 >= rows_target:
        # big per-batch planes: tile the row axis, one batch item per step
        bt = 1
        num_row_tiles = pl.cdiv(rows_b8, rows_target)
        row_tile = _round_up(pl.cdiv(rows_b8, num_row_tiles), 8)
        rows_b_pad = num_row_tiles * row_tile
        num_b_tiles = B
    else:
        # small per-batch planes: whole batch item per block, tile over batch
        row_tile = rows_b8
        num_row_tiles = 1
        rows_b_pad = row_tile
        desired_bt = max(1, rows_target // row_tile)
        if B > 1:
            # keep >= 2 grid steps so the "parallel" axis can split across
            # the two v7x TensorCores
            desired_bt = min(desired_bt, max(1, B // 2))
        bt = 1
        for d in range(min(desired_bt, B), 0, -1):
            if B % d == 0:
                bt = d
                break
        num_b_tiles = B // bt
    return bt, row_tile, num_b_tiles, num_row_tiles, rows_b_pad


# ----------------------------------------------------------------------------
# Fused kernel: log_softmax (in-register) + select_cross_entropy partials +
# weight_l1 partials + convert_loc.  Blocks are (bt, [lead,] row_tile, LANES).
# ----------------------------------------------------------------------------
def _fused_kernel(cls_ref, lab_ref, loc_ref, tgt_ref, w_ref, anc_ref,
                  box_ref, part_ref):
    cls = cls_ref[...]        # (bt, 2, rt, L)
    loc = loc_ref[...]        # (bt, 4, rt, L)
    tgt = tgt_ref[...]        # (bt, 4, rt, L)
    anc = anc_ref[...]        # (bt, 4, rt, L)
    label = lab_ref[...]      # (bt, rt, L)
    w = w_ref[...]            # (bt, rt, L)

    # --- 2-class log_softmax, softplus form: 1 exp + 1 log per element ---
    # (log(1 + exp(-|d|)) kept over log1p: diff < 1.2e-7 in f32, guaranteed
    #  Mosaic lowering)
    p0 = cls[:, 0]
    p1 = cls[:, 1]
    d = p0 - p1
    sp = jnp.log(1.0 + jnp.exp(-jnp.abs(d)))
    logp1 = -(jnp.maximum(d, 0.0) + sp)      # = p1 - logsumexp(p0, p1)
    logp0 = -(jnp.maximum(-d, 0.0) + sp)     # = p0 - logsumexp(p0, p1)

    # --- select_cross_entropy masks (padding carries label == -1 -> ignored) ---
    pos = (label == 1.0).astype(jnp.float32)
    neg = (label == 0.0).astype(jnp.float32)

    # --- weight_l1_loss (padding carries weight == 0) ---
    l0 = loc[:, 0]
    l1 = loc[:, 1]
    l2 = loc[:, 2]
    l3 = loc[:, 3]
    diff = (jnp.abs(l0 - tgt[:, 0]) + jnp.abs(l1 - tgt[:, 1]) +
            jnp.abs(l2 - tgt[:, 2]) + jnp.abs(l3 - tgt[:, 3]))
    wl1 = diff * w

    # --- convert_loc fused in (loc already VMEM resident); output stays
    # lane-dense: the 4-wide axis never becomes the kernel's last dim ---
    ax = anc[:, 0]
    ay = anc[:, 1]
    aw = anc[:, 2]
    ah = anc[:, 3]
    cx = l0 * aw + ax
    cy = l1 * ah + ay
    bw = jnp.exp(l2) * aw
    bh = jnp.exp(l3) * ah
    box_ref[...] = jnp.stack(
        [cx - 0.5 * bw, cy - 0.5 * bh, cx + 0.5 * bw, cy + 0.5 * bh], axis=1)

    # --- per-lane partial sums: reduce only over the batch/row axes (pure
    # VPU vreg adds + one sublane reduce); the 128-lane reduce is finished in
    # the wrapper on the tiny partials array ---
    def lane_sum(x):
        return jnp.sum(x.reshape(-1, LANES), axis=0, keepdims=True)  # (1, L)

    part = jnp.concatenate(
        [lane_sum(-logp1 * pos), lane_sum(pos),
         lane_sum(-logp0 * neg), lane_sum(neg),
         lane_sum(wl1),
         jnp.zeros((3, LANES), jnp.float32)], axis=0)                 # (8, L)
    part_ref[...] = part[None, None]


# ----------------------------------------------------------------------------
# Wrapper: free reshapes + padding only (no transposes), single pallas_call,
# scalar combine in XLA.
# ----------------------------------------------------------------------------
def fused_rpn_forward(cls, loc, label_cls, label_loc, label_loc_weight, anchor):
    """cls: [B,2K,H,W], loc: [B,4K,H,W], label_cls: [B,K,H,W],
    label_loc/anchor: [B,4,K,H,W], label_loc_weight: [B,K,H,W]."""
    B, a2, H, W = cls.shape
    K = a2 // 2
    n_b = K * H * W                       # elements per batch item

    vmem_cap = _vmem_capacity_bytes()
    # ~20 f32 planes per step, double-buffered; 1024 rows on 128 MiB parts
    # (v5e/v6e), 512 rows on 64 MiB (v7x).
    rows_target = 1024 if vmem_cap >= (96 << 20) else 512

    bt, row_tile, num_b_tiles, num_row_tiles, rows_b_pad = _tile_plan(
        B, pl.cdiv(n_b, LANES), rows_target)
    n_b_pad = rows_b_pad * LANES

    def stacked(x, lead, pad_val=0.0):
        # (B, lead*K, H, W) or (B, lead, K, H, W) -> (B, lead, rows_b_pad, L)
        # contiguous reshape (free) + pad only; no transposes.
        x = x.reshape(B, lead, n_b).astype(jnp.float32)
        return _pad_last(x, n_b_pad, pad_val).reshape(B, lead, rows_b_pad, LANES)

    def plane(x, pad_val):
        x = x.reshape(B, n_b).astype(jnp.float32)
        return _pad_last(x, n_b_pad, pad_val).reshape(B, rows_b_pad, LANES)

    cls_pk = stacked(cls, 2)
    loc_pk = stacked(loc, 4)
    tgt_pk = stacked(label_loc, 4)
    anc_pk = stacked(anchor, 4)
    lab_pk = plane(label_cls, -1.0)          # padding labelled "ignore"
    w_pk = plane(label_loc_weight, 0.0)      # padding has zero weight

    lead2 = pl.BlockSpec((bt, 2, row_tile, LANES), lambda b, i: (b, 0, i, 0))
    lead4 = pl.BlockSpec((bt, 4, row_tile, LANES), lambda b, i: (b, 0, i, 0))
    planes = pl.BlockSpec((bt, row_tile, LANES), lambda b, i: (b, i, 0))
    parts = pl.BlockSpec((1, 1, 8, LANES), lambda b, i: (b, i, 0, 0))

    # double-buffered I/O working set (+ headroom for elementwise temporaries)
    io_bytes = 20 * bt * row_tile * LANES * 4
    vmem_limit = int(min(max(2 * io_bytes + (16 << 20), 32 << 20),
                         3 * vmem_cap // 4))

    boxes, partials = pl.pallas_call(
        _fused_kernel,
        out_shape=(
            jax.ShapeDtypeStruct((B, 4, rows_b_pad, LANES), jnp.float32),
            jax.ShapeDtypeStruct((num_b_tiles, num_row_tiles, 8, LANES),
                                 jnp.float32),
        ),
        grid=(num_b_tiles, num_row_tiles),
        in_specs=[lead2, planes, lead4, lead4, planes, lead4],
        out_specs=(lead4, parts),
        compiler_params=pltpu.CompilerParams(
            dimension_semantics=("parallel", "parallel"),
            vmem_limit_bytes=vmem_limit),
    )(cls_pk, lab_pk, loc_pk, tgt_pk, w_pk, anc_pk)

    # finish the 128-lane reduce on the tiny partials array (XLA side)
    p = jnp.sum(partials[:, :, :5, :], axis=(0, 1, 3))
    s_pos, n_pos, s_neg, n_neg, s_l1 = p[0], p[1], p[2], p[3], p[4]
    loss_pos = jnp.where(n_pos > 0, s_pos / jnp.maximum(n_pos, 1.0), 0.0)
    loss_neg = jnp.where(n_neg > 0, s_neg / jnp.maximum(n_neg, 1.0), 0.0)
    cls_loss = 0.5 * loss_pos + 0.5 * loss_neg
    loc_loss = s_l1 * (1.0 / float(B))
    total_loss = CLS_WEIGHT * cls_loss + LOC_WEIGHT * loc_loss

    # convert_loc output: kernel output stays lane-dense; a single XLA
    # transpose reproduces torch.stack((x1,y1,x2,y2), dim=2) -> (B, K*H*W, 4)
    bbox = boxes.reshape(B, 4, n_b_pad)[:, :, :n_b]
    bbox = jnp.transpose(bbox, (0, 2, 1))

    return bbox, cls_loss, loc_loss, total_loss


# ----------------------------------------------------------------------------
# Forward wrapper mirroring ModelBuilder.forward()'s loss path.
# ----------------------------------------------------------------------------
def model_builder_forward(data):
    cls = data['cls']                            # rpn_head cls output [B,2K,H,W]
    loc = data['loc']                            # rpn_head loc output [B,4K,H,W]
    label_cls = data['label_cls']                # [B,K,H,W] in {-1,0,1}
    label_loc = data['label_loc']                # [B,4,K,H,W]
    label_loc_weight = data['label_loc_weight']  # [B,K,H,W]
    anchor = data['anchor_center']               # [B,4,K,H,W]

    # convert_loc is fused into the loss kernel; the original uses loc.detach()
    # for the refine branch -- bbox is a forward-only quantity here.
    bbox, cls_loss, loc_loss, total_loss = fused_rpn_forward(
        cls, loc, label_cls, label_loc, label_loc_weight, anchor)

    # TODO(synk): build_proposal_target / build_mask_target / feature_fusion /
    # refine_head / mask_head losses need external cfg-defined sub-modules.

    return {
        'total_loss': total_loss,
        'cls_loss': cls_loss,
        'loc_loss': loc_loss,
        'bbox': bbox,
    }


if __name__ == "__main__":
    key = jax.random.PRNGKey(0)
    B, K, H, W = 2, 5, 8, 8
    k1, k2, k3, k4, k5, k6 = jax.random.split(key, 6)

    cls = jax.random.normal(k1, (B, 2 * K, H, W), jnp.float32)
    loc = 0.1 * jax.random.normal(k2, (B, 4 * K, H, W), jnp.float32)
    label_cls = jax.random.randint(k3, (B, K, H, W), -1, 2).astype(jnp.float32)
    # guarantee at least one positive and one negative sample
    label_cls = label_cls.at[0, 0, 0, 0].set(1.0).at[0, 0, 0, 1].set(0.0)
    label_loc = jax.random.normal(k4, (B, 4, K, H, W), jnp.float32)
    label_loc_weight = jax.random.uniform(k5, (B, K, H, W), jnp.float32)
    anchor_center = jnp.abs(
        jax.random.normal(k6, (B, 4, K, H, W), jnp.float32)) + 1.0

    data = {
        'cls': cls,
        'loc': loc,
        'label_cls': label_cls,
        'label_loc': label_loc,
        'label_loc_weight': label_loc_weight,
        'anchor_center': anchor_center,
    }

    out = model_builder_forward(data)
    jax.block_until_ready(out)

    # ---------------- reference check in plain JAX ----------------
    cls5 = cls.reshape(B, 2, K, H, W).transpose(0, 2, 3, 4, 1)
    ref_log = jax.nn.log_softmax(cls5, axis=-1)

    pos_m = label_cls == 1.0
    neg_m = label_cls == 0.0
    n_pos = jnp.maximum(pos_m.sum().astype(jnp.float32), 1.0)
    n_neg = jnp.maximum(neg_m.sum().astype(jnp.float32), 1.0)
    ref_cls_loss = (0.5 * jnp.sum(jnp.where(pos_m, -ref_log[..., 1], 0.0)) / n_pos +
                    0.5 * jnp.sum(jnp.where(neg_m, -ref_log[..., 0], 0.0)) / n_neg)
    diff = jnp.abs(loc.reshape(B, 4, K, H, W) - label_loc).sum(axis=1)
    ref_loc_loss = (diff * label_loc_weight).sum() / B
    ref_total = CLS_WEIGHT * ref_cls_loss + LOC_WEIGHT * ref_loc_loss
    assert jnp.allclose(out['cls_loss'], ref_cls_loss, rtol=1e-5, atol=1e-4)
    assert jnp.allclose(out['loc_loss'], ref_loc_loss, rtol=1e-5, atol=1e-3)
    assert jnp.allclose(out['total_loss'], ref_total, rtol=1e-5, atol=1e-3)

    loc5 = loc.reshape(B, 4, K, H, W)
    cx = loc5[:, 0] * anchor_center[:, 2] + anchor_center[:, 0]
    cy = loc5[:, 1] * anchor_center[:, 3] + anchor_center[:, 1]
    bw = jnp.exp(loc5[:, 2]) * anchor_center[:, 2]
    bh = jnp.exp(loc5[:, 3]) * anchor_center[:, 3]
    ref_bbox = jnp.stack([(cx - bw / 2).reshape(B, -1),
                          (cy - bh / 2).reshape(B, -1),
                          (cx + bw / 2).reshape(B, -1),
                          (cy + bh / 2).reshape(B, -1)], axis=2)
    assert out['bbox'].shape == (B, K * H * W, 4)
    assert jnp.allclose(out['bbox'], ref_bbox, rtol=1e-5, atol=1e-5), "convert_loc mismatch"
    assert jnp.isfinite(out['total_loss'])

    print("KERNEL_OK")
</pallas_src>

<mosaic_0001>
module attributes {stable_mosaic.version = 11 : i64} {
  func.func @_fused_kernel(%arg0: i32, %arg1: i32, %arg2: memref<1x2x8x128xf32, #tpu.memory_space<vmem>>, %arg3: memref<1x8x128xf32, #tpu.memory_space<vmem>>, %arg4: memref<1x4x8x128xf32, #tpu.memory_space<vmem>>, %arg5: memref<1x4x8x128xf32, #tpu.memory_space<vmem>>, %arg6: memref<1x8x128xf32, #tpu.memory_space<vmem>>, %arg7: memref<1x4x8x128xf32, #tpu.memory_space<vmem>>, %arg8: memref<1x4x8x128xf32, #tpu.memory_space<vmem>>, %arg9: memref<1x1x8x128xf32, #tpu.memory_space<vmem>>) attributes {dimension_semantics = [#tpu.dimension_semantics<parallel>, #tpu.dimension_semantics<parallel>], iteration_bounds = array<i64: 2, 1>, scalar_prefetch = 0 : i64, scratch_operands = 0 : i64, tpu.core_type = #tpu.core_type<tc>, window_params = [{transform_indices = @transform_0, window_bounds = array<i64: 1, 2, 8, 128>}, {transform_indices = @transform_1, window_bounds = array<i64: 1, 8, 128>}, {transform_indices = @transform_2, window_bounds = array<i64: 1, 4, 8, 128>}, {transform_indices = @transform_3, window_bounds = array<i64: 1, 4, 8, 128>}, {transform_indices = @transform_4, window_bounds = array<i64: 1, 8, 128>}, {transform_indices = @transform_5, window_bounds = array<i64: 1, 4, 8, 128>}, {transform_indices = @transform_6, window_bounds = array<i64: 1, 4, 8, 128>}, {transform_indices = @transform_7, window_bounds = array<i64: 1, 1, 8, 128>}]} {
    %c0 = arith.constant 0 : index
    %c0_0 = arith.constant 0 : index
    %c0_1 = arith.constant 0 : index
    %c0_2 = arith.constant 0 : index
    %0 = vector.load %arg2[%c0, %c0_0, %c0_1, %c0_2] : memref<1x2x8x128xf32, #tpu.memory_space<vmem>>, vector<1x2x8x128xf32>
    %c0_3 = arith.constant 0 : index
    %c0_4 = arith.constant 0 : index
    %c0_5 = arith.constant 0 : index
    %c0_6 = arith.constant 0 : index
    %1 = vector.load %arg4[%c0_3, %c0_4, %c0_5, %c0_6] : memref<1x4x8x128xf32, #tpu.memory_space<vmem>>, vector<1x4x8x128xf32>
    %c0_7 = arith.constant 0 : index
    %c0_8 = arith.constant 0 : index
    %c0_9 = arith.constant 0 : index
    %c0_10 = arith.constant 0 : index
    %2 = vector.load %arg5[%c0_7, %c0_8, %c0_9, %c0_10] : memref<1x4x8x128xf32, #tpu.memory_space<vmem>>, vector<1x4x8x128xf32>
    %c0_11 = arith.constant 0 : index
    %c0_12 = arith.constant 0 : index
    %c0_13 = arith.constant 0 : index
    %c0_14 = arith.constant 0 : index
    %3 = vector.load %arg7[%c0_11, %c0_12, %c0_13, %c0_14] : memref<1x4x8x128xf32, #tpu.memory_space<vmem>>, vector<1x4x8x128xf32>
    %c0_15 = arith.constant 0 : index
    %c0_16 = arith.constant 0 : index
    %c0_17 = arith.constant 0 : index
    %4 = vector.load %arg3[%c0_15, %c0_16, %c0_17] : memref<1x8x128xf32, #tpu.memory_space<vmem>>, vector<1x8x128xf32>
    %c0_18 = arith.constant 0 : index
    %c0_19 = arith.constant 0 : index
    %c0_20 = arith.constant 0 : index
    %5 = vector.load %arg6[%c0_18, %c0_19, %c0_20] : memref<1x8x128xf32, #tpu.memory_space<vmem>>, vector<1x8x128xf32>
    %6 = vector.extract_strided_slice %0 {offsets = [0, 0, 0, 0], sizes = [1, 1, 8, 128], strides = [1, 1, 1, 1]} : vector<1x2x8x128xf32> to vector<1x1x8x128xf32>
    %7 = vector.shape_cast %6 : vector<1x1x8x128xf32> to vector<1x8x128xf32>
    %8 = vector.extract_strided_slice %0 {offsets = [0, 1, 0, 0], sizes = [1, 1, 8, 128], strides = [1, 1, 1, 1]} : vector<1x2x8x128xf32> to vector<1x1x8x128xf32>
    %9 = vector.shape_cast %8 : vector<1x1x8x128xf32> to vector<1x8x128xf32>
    %10 = arith.subf %7, %9 : vector<1x8x128xf32>
    %11 = math.absf %10 : vector<1x8x128xf32>
    %cst = arith.constant 0.000000e+00 : f32
    %12 = vector.broadcast %cst : f32 to vector<1x8x128xf32>
    %13 = arith.subf %12, %11 : vector<1x8x128xf32>
    %14 = math.exp %13 : vector<1x8x128xf32>
    %cst_21 = arith.constant 1.000000e+00 : f32
    %15 = vector.broadcast %cst_21 : f32 to vector<1x8x128xf32>
    %16 = arith.addf %15, %14 : vector<1x8x128xf32>
    %17 = math.log %16 : vector<1x8x128xf32>
    %cst_22 = arith.constant 0.000000e+00 : f32
    %18 = vector.broadcast %cst_22 : f32 to vector<1x8x128xf32>
    %19 = arith.maximumf %10, %18 : vector<1x8x128xf32>
    %20 = arith.addf %19, %17 : vector<1x8x128xf32>
    %cst_23 = arith.constant 0.000000e+00 : f32
    %21 = vector.broadcast %cst_23 : f32 to vector<1x8x128xf32>
    %22 = arith.subf %21, %20 : vector<1x8x128xf32>
    %cst_24 = arith.constant 0.000000e+00 : f32
    %23 = vector.broadcast %cst_24 : f32 to vector<1x8x128xf32>
    %24 = arith.subf %23, %10 : vector<1x8x128xf32>
    %cst_25 = arith.constant 0.000000e+00 : f32
    %25 = vector.broadcast %cst_25 : f32 to vector<1x8x128xf32>
    %26 = arith.maximumf %24, %25 : vector<1x8x128xf32>
    %27 = arith.addf %26, %17 : vector<1x8x128xf32>
    %cst_26 = arith.constant 0.000000e+00 : f32
    %28 = vector.broadcast %cst_26 : f32 to vector<1x8x128xf32>
    %29 = arith.subf %28, %27 : vector<1x8x128xf32>
    %cst_27 = arith.constant 1.000000e+00 : f32
    %30 = vector.broadcast %cst_27 : f32 to vector<1x8x128xf32>
    %31 = arith.cmpf oeq, %4, %30 : vector<1x8x128xf32>
    %32 = arith.extui %31 : vector<1x8x128xi1> to vector<1x8x128xi32>
    %33 = arith.sitofp %32 : vector<1x8x128xi32> to vector<1x8x128xf32>
    %cst_28 = arith.constant 0.000000e+00 : f32
    %34 = vector.broadcast %cst_28 : f32 to vector<1x8x128xf32>
    %35 = arith.cmpf oeq, %4, %34 : vector<1x8x128xf32>
    %36 = arith.extui %35 : vector<1x8x128xi1> to vector<1x8x128xi32>
    %37 = arith.sitofp %36 : vector<1x8x128xi32> to vector<1x8x128xf32>
    %38 = vector.extract_strided_slice %1 {offsets = [0, 0, 0, 0], sizes = [1, 1, 8, 128], strides = [1, 1, 1, 1]} : vector<1x4x8x128xf32> to vector<1x1x8x128xf32>
    %39 = vector.shape_cast %38 : vector<1x1x8x128xf32> to vector<1x8x128xf32>
    %40 = vector.extract_strided_slice %1 {offsets = [0, 1, 0, 0], sizes = [1, 1, 8, 128], strides = [1, 1, 1, 1]} : vector<1x4x8x128xf32> to vector<1x1x8x128xf32>
    %41 = vector.shape_cast %40 : vector<1x1x8x128xf32> to vector<1x8x128xf32>
    %42 = vector.extract_strided_slice %1 {offsets = [0, 2, 0, 0], sizes = [1, 1, 8, 128], strides = [1, 1, 1, 1]} : vector<1x4x8x128xf32> to vector<1x1x8x128xf32>
    %43 = vector.shape_cast %42 : vector<1x1x8x128xf32> to vector<1x8x128xf32>
    %44 = vector.extract_strided_slice %1 {offsets = [0, 3, 0, 0], sizes = [1, 1, 8, 128], strides = [1, 1, 1, 1]} : vector<1x4x8x128xf32> to vector<1x1x8x128xf32>
    %45 = vector.shape_cast %44 : vector<1x1x8x128xf32> to vector<1x8x128xf32>
    %46 = vector.extract_strided_slice %2 {offsets = [0, 0, 0, 0], sizes = [1, 1, 8, 128], strides = [1, 1, 1, 1]} : vector<1x4x8x128xf32> to vector<1x1x8x128xf32>
    %47 = vector.shape_cast %46 : vector<1x1x8x128xf32> to vector<1x8x128xf32>
    %48 = arith.subf %39, %47 : vector<1x8x128xf32>
    %49 = math.absf %48 : vector<1x8x128xf32>
    %50 = vector.extract_strided_slice %2 {offsets = [0, 1, 0, 0], sizes = [1, 1, 8, 128], strides = [1, 1, 1, 1]} : vector<1x4x8x128xf32> to vector<1x1x8x128xf32>
    %51 = vector.shape_cast %50 : vector<1x1x8x128xf32> to vector<1x8x128xf32>
    %52 = arith.subf %41, %51 : vector<1x8x128xf32>
    %53 = math.absf %52 : vector<1x8x128xf32>
    %54 = arith.addf %49, %53 : vector<1x8x128xf32>
    %55 = vector.extract_strided_slice %2 {offsets = [0, 2, 0, 0], sizes = [1, 1, 8, 128], strides = [1, 1, 1, 1]} : vector<1x4x8x128xf32> to vector<1x1x8x128xf32>
    %56 = vector.shape_cast %55 : vector<1x1x8x128xf32> to vector<1x8x128xf32>
    %57 = arith.subf %43, %56 : vector<1x8x128xf32>
    %58 = math.absf %57 : vector<1x8x128xf32>
    %59 = arith.addf %54, %58 : vector<1x8x128xf32>
    %60 = vector.extract_strided_slice %2 {offsets = [0, 3, 0, 0], sizes = [1, 1, 8, 128], strides = [1, 1, 1, 1]} : vector<1x4x8x128xf32> to vector<1x1x8x128xf32>
    %61 = vector.shape_cast %60 : vector<1x1x8x128xf32> to vector<1x8x128xf32>
    %62 = arith.subf %45, %61 : vector<1x8x128xf32>
    %63 = math.absf %62 : vector<1x8x128xf32>
    %64 = arith.addf %59, %63 : vector<1x8x128xf32>
    %65 = arith.mulf %64, %5 : vector<1x8x128xf32>
    %66 = vector.extract_strided_slice %3 {offsets = [0, 0, 0, 0], sizes = [1, 1, 8, 128], strides = [1, 1, 1, 1]} : vector<1x4x8x128xf32> to vector<1x1x8x128xf32>
    %67 = vector.shape_cast %66 : vector<1x1x8x128xf32> to vector<1x8x128xf32>
    %68 = vector.extract_strided_slice %3 {offsets = [0, 1, 0, 0], sizes = [1, 1, 8, 128], strides = [1, 1, 1, 1]} : vector<1x4x8x128xf32> to vector<1x1x8x128xf32>
    %69 = vector.shape_cast %68 : vector<1x1x8x128xf32> to vector<1x8x128xf32>
    %70 = vector.extract_strided_slice %3 {offsets = [0, 2, 0, 0], sizes = [1, 1, 8, 128], strides = [1, 1, 1, 1]} : vector<1x4x8x128xf32> to vector<1x1x8x128xf32>
    %71 = vector.shape_cast %70 : vector<1x1x8x128xf32> to vector<1x8x128xf32>
    %72 = vector.extract_strided_slice %3 {offsets = [0, 3, 0, 0], sizes = [1, 1, 8, 128], strides = [1, 1, 1, 1]} : vector<1x4x8x128xf32> to vector<1x1x8x128xf32>
    %73 = vector.shape_cast %72 : vector<1x1x8x128xf32> to vector<1x8x128xf32>
    %74 = arith.mulf %39, %71 : vector<1x8x128xf32>
    %75 = arith.addf %74, %67 : vector<1x8x128xf32>
    %76 = arith.mulf %41, %73 : vector<1x8x128xf32>
    %77 = arith.addf %76, %69 : vector<1x8x128xf32>
    %78 = math.exp %43 : vector<1x8x128xf32>
    %79 = arith.mulf %78, %71 : vector<1x8x128xf32>
    %80 = math.exp %45 : vector<1x8x128xf32>
    %81 = arith.mulf %80, %73 : vector<1x8x128xf32>
    %cst_29 = arith.constant 5.000000e-01 : f32
    %82 = vector.broadcast %cst_29 : f32 to vector<1x8x128xf32>
    %83 = arith.mulf %82, %79 : vector<1x8x128xf32>
    %84 = arith.subf %75, %83 : vector<1x8x128xf32>
    %cst_30 = arith.constant 5.000000e-01 : f32
    %85 = vector.broadcast %cst_30 : f32 to vector<1x8x128xf32>
    %86 = arith.mulf %85, %81 : vector<1x8x128xf32>
    %87 = arith.subf %77, %86 : vector<1x8x128xf32>
    %cst_31 = arith.constant 5.000000e-01 : f32
    %88 = vector.broadcast %cst_31 : f32 to vector<1x8x128xf32>
    %89 = arith.mulf %88, %79 : vector<1x8x128xf32>
    %90 = arith.addf %75, %89 : vector<1x8x128xf32>
    %cst_32 = arith.constant 5.000000e-01 : f32
    %91 = vector.broadcast %cst_32 : f32 to vector<1x8x128xf32>
    %92 = arith.mulf %91, %81 : vector<1x8x128xf32>
    %93 = arith.addf %77, %92 : vector<1x8x128xf32>
    %94 = vector.shape_cast %84 : vector<1x8x128xf32> to vector<1x1x8x128xf32>
    %95 = vector.shape_cast %87 : vector<1x8x128xf32> to vector<1x1x8x128xf32>
    %96 = vector.shape_cast %90 : vector<1x8x128xf32> to vector<1x1x8x128xf32>
    %97 = vector.shape_cast %93 : vector<1x8x128xf32> to vector<1x1x8x128xf32>
    %98 = tpu.concatenate %94, %95, %96, %97 in 1 : vector<1x1x8x128xf32>, vector<1x1x8x128xf32>, vector<1x1x8x128xf32>, vector<1x1x8x128xf32> -> vector<1x4x8x128xf32>
    %c0_33 = arith.constant 0 : index
    %c0_34 = arith.constant 0 : index
    %c0_35 = arith.constant 0 : index
    %c0_36 = arith.constant 0 : index
    %99 = vector.load %arg8[%c0_33, %c0_34, %c0_35, %c0_36] : memref<1x4x8x128xf32, #tpu.memory_space<vmem>>, vector<1x4x8x128xf32>
    tpu.vector_store %arg8[%c0_33, %c0_34, %c0_35, %c0_36], %98 {strides = array<i32>} : memref<1x4x8x128xf32, #tpu.memory_space<vmem>>, vector<1x4x8x128xf32>,
    %cst_37 = arith.constant 0.000000e+00 : f32
    %100 = vector.broadcast %cst_37 : f32 to vector<1x8x128xf32>
    %101 = arith.subf %100, %22 : vector<1x8x128xf32>
    %102 = arith.mulf %101, %33 : vector<1x8x128xf32>
    %103 = vector.shape_cast %102 : vector<1x8x128xf32> to vector<8x128xf32>
    %cst_38 = arith.constant dense<0.000000e+00> : vector<128xf32>
    %104 = vector.multi_reduction <add>, %103, %cst_38 [0] : vector<8x128xf32> to vector<128xf32>
    %105 = vector.shape_cast %104 : vector<128xf32> to vector<1x128xf32>
    %106 = vector.shape_cast %33 : vector<1x8x128xf32> to vector<8x128xf32>
    %cst_39 = arith.constant dense<0.000000e+00> : vector<128xf32>
    %107 = vector.multi_reduction <add>, %106, %cst_39 [0] : vector<8x128xf32> to vector<128xf32>
    %108 = vector.shape_cast %107 : vector<128xf32> to vector<1x128xf32>
    %cst_40 = arith.constant 0.000000e+00 : f32
    %109 = vector.broadcast %cst_40 : f32 to vector<1x8x128xf32>
    %110 = arith.subf %109, %29 : vector<1x8x128xf32>
    %111 = arith.mulf %110, %37 : vector<1x8x128xf32>
    %112 = vector.shape_cast %111 : vector<1x8x128xf32> to vector<8x128xf32>
    %cst_41 = arith.constant dense<0.000000e+00> : vector<128xf32>
    %113 = vector.multi_reduction <add>, %112, %cst_41 [0] : vector<8x128xf32> to vector<128xf32>
    %114 = vector.shape_cast %113 : vector<128xf32> to vector<1x128xf32>
    %115 = vector.shape_cast %37 : vector<1x8x128xf32> to vector<8x128xf32>
    %cst_42 = arith.constant dense<0.000000e+00> : vector<128xf32>
    %116 = vector.multi_reduction <add>, %115, %cst_42 [0] : vector<8x128xf32> to vector<128xf32>
    %117 = vector.shape_cast %116 : vector<128xf32> to vector<1x128xf32>
    %118 = vector.shape_cast %65 : vector<1x8x128xf32> to vector<8x128xf32>
    %cst_43 = arith.constant dense<0.000000e+00> : vector<128xf32>
    %119 = vector.multi_reduction <add>, %118, %cst_43 [0] : vector<8x128xf32> to vector<128xf32>
    %120 = vector.shape_cast %119 : vector<128xf32> to vector<1x128xf32>
    %cst_44 = arith.constant 0.000000e+00 : f32
    %121 = vector.broadcast %cst_44 : f32 to vector<3x128xf32>
    %122 = tpu.concatenate %105, %108, %114, %117, %120, %121 in 0 : vector<1x128xf32>, vector<1x128xf32>, vector<1x128xf32>, vector<1x128xf32>, vector<1x128xf32>, vector<3x128xf32> -> vector<8x128xf32>
    %123 = vector.shape_cast %122 : vector<8x128xf32> to vector<1x1x8x128xf32>
    %c0_45 = arith.constant 0 : index
    %c0_46 = arith.constant 0 : index
    %c0_47 = arith.constant 0 : index
    %c0_48 = arith.constant 0 : index
    %124 = vector.load %arg9[%c0_45, %c0_46, %c0_47, %c0_48] : memref<1x1x8x128xf32, #tpu.memory_space<vmem>>, vector<1x1x8x128xf32>
    tpu.vector_store %arg9[%c0_45, %c0_46, %c0_47, %c0_48], %123 {strides = array<i32>} : memref<1x1x8x128xf32, #tpu.memory_space<vmem>>, vector<1x1x8x128xf32>,
    return
  }
  func.func @transform_0(%arg0: i32, %arg1: i32) -> (i32, i32, i32, i32) {
    %c0_i32 = arith.constant 0 : i32
    %c0_i32_0 = arith.constant 0 : i32
    %c0_i32_1 = arith.constant 0 : i32
    return %arg0, %c0_i32, %arg1, %c0_i32_0 : i32, i32, i32, i32
  }
  func.func @transform_1(%arg0: i32, %arg1: i32) -> (i32, i32, i32) {
    %c0_i32 = arith.constant 0 : i32
    %c0_i32_0 = arith.constant 0 : i32
    return %arg0, %arg1, %c0_i32 : i32, i32, i32
  }
  func.func @transform_2(%arg0: i32, %arg1: i32) -> (i32, i32, i32, i32) {
    %c0_i32 = arith.constant 0 : i32
    %c0_i32_0 = arith.constant 0 : i32
    %c0_i32_1 = arith.constant 0 : i32
    return %arg0, %c0_i32, %arg1, %c0_i32_0 : i32, i32, i32, i32
  }
  func.func @transform_3(%arg0: i32, %arg1: i32) -> (i32, i32, i32, i32) {
    %c0_i32 = arith.constant 0 : i32
    %c0_i32_0 = arith.constant 0 : i32
    %c0_i32_1 = arith.constant 0 : i32
    return %arg0, %c0_i32, %arg1, %c0_i32_0 : i32, i32, i32, i32
  }
  func.func @transform_4(%arg0: i32, %arg1: i32) -> (i32, i32, i32) {
    %c0_i32 = arith.constant 0 : i32
    %c0_i32_0 = arith.constant 0 : i32
    return %arg0, %arg1, %c0_i32 : i32, i32, i32
  }
  func.func @transform_5(%arg0: i32, %arg1: i32) -> (i32, i32, i32, i32) {
    %c0_i32 = arith.constant 0 : i32
    %c0_i32_0 = arith.constant 0 : i32
    %c0_i32_1 = arith.constant 0 : i32
    return %arg0, %c0_i32, %arg1, %c0_i32_0 : i32, i32, i32, i32
  }
  func.func @transform_6(%arg0: i32, %arg1: i32) -> (i32, i32, i32, i32) {
    %c0_i32 = arith.constant 0 : i32
    %c0_i32_0 = arith.constant 0 : i32
    %c0_i32_1 = arith.constant 0 : i32
    return %arg0, %c0_i32, %arg1, %c0_i32_0 : i32, i32, i32, i32
  }
  func.func @transform_7(%arg0: i32, %arg1: i32) -> (i32, i32, i32, i32) {
    %c0_i32 = arith.constant 0 : i32
    %c0_i32_0 = arith.constant 0 : i32
    %c0_i32_1 = arith.constant 0 : i32
    return %arg0, %arg1, %c0_i32, %c0_i32_0 : i32, i32, i32, i32
  }
}

</mosaic_0001>

<llo_original>
// kernel: tpu_custom_call.1
$region0: #{tpu_custom_call.1}
  #allocation0 [shape = 'u32[]', space=smem, size = 0x4, offset = 0x4, fixed_abs, tag = 'smem constant byte address 0x4 - core index']
  #allocation1 [shape = 'u32[144,128]{1,0:T(1,128)}', space=vmem, size = 0x12000, scoped, tag = 'internal scratch']
  %s0 = inlined_call_operand.hbm [shape: f32[2,2,8,128], index: 0, kind: input, shape index: {}]
  %s1 = inlined_call_operand.hbm [shape: f32[2,8,128], index: 1, kind: input, shape index: {}]
  %s2 = inlined_call_operand.hbm [shape: f32[2,4,8,128], index: 2, kind: input, shape index: {}]
  %s3 = inlined_call_operand.hbm [shape: f32[2,4,8,128], index: 3, kind: input, shape index: {}]
  %s4 = inlined_call_operand.hbm [shape: f32[2,8,128], index: 4, kind: input, shape index: {}]
  %s5 = inlined_call_operand.hbm [shape: f32[2,4,8,128], index: 5, kind: input, shape index: {}]
  %s6 = inlined_call_operand.hbm [shape: f32[2,4,8,128], index: 6, kind: output, shape index: {0}]
  %s7 = inlined_call_operand.hbm [shape: f32[2,1,8,128], index: 7, kind: output, shape index: {1}]
  %8 = xla_tuple %s6, %s7
  %s9 = sld [smem:[#allocation0]]
  $region89: #{tpu_custom_call.1} parent=0
    _
  %s11 = ssub.s32 1, %s9
  %s12 = scalar_select 0, %s11, %s9
  $region1: #{tpu_custom_call.1} parent=0
    #allocation2 [shape = 'u8[16384]{0}', space=vmem, size = 0x4000, scoped, tag = 'input window, operand 0']
    #allocation3 [shape = 's32[2]{0}', space=sflag, size = 0x8, scoped, tag = 'scoped memory for tpu_custom_call.1']
    #allocation4 [shape = 's32[2]{0}', space=sflag, size = 0x8, scoped, tag = 'scoped memory for tpu_custom_call.1']
    #allocation5 [shape = 'u8[8192]{0}', space=vmem, size = 0x2000, scoped, tag = 'input window, operand 1']
    #allocation6 [shape = 's32[2]{0}', space=sflag, size = 0x8, scoped, tag = 'scoped memory for tpu_custom_call.1']
    #allocation7 [shape = 'u8[32768]{0}', space=vmem, size = 0x8000, scoped, tag = 'input window, operand 2']
    #allocation8 [shape = 'u8[32768]{0}', space=vmem, size = 0x8000, scoped, tag = 'input window, operand 3']
    #allocation9 [shape = 's32[2]{0}', space=sflag, size = 0x8, scoped, tag = 'scoped memory for tpu_custom_call.1']
    #allocation10 [shape = 'u8[8192]{0}', space=vmem, size = 0x2000, scoped, tag = 'input window, operand 4']
    #allocation11 [shape = 'u8[32768]{0}', space=vmem, size = 0x8000, scoped, tag = 'input window, operand 5']
    #allocation12 [shape = 's32[2]{0}', space=sflag, size = 0x8, scoped, tag = 'scoped memory for tpu_custom_call.1']
    #allocation13 [shape = 'u8[32768]{0}', space=vmem, size = 0x8000, scoped, tag = 'output window, operand 0']
    #allocation14 [shape = 'u8[8192]{0}', space=vmem, size = 0x2000, scoped, tag = 'output window, operand 1']
    #allocation15 [shape = 's32[2]{0}', space=sflag, size = 0x8, scoped, tag = 'scoped memory for tpu_custom_call.1']
    %13 = vsyncpa [#allocation3], 0
    %s14 = scalar_lea.sflag [#allocation3], 1
    %15 = vsyncpa %s14, 0
    %16 = vsyncpa [#allocation6], 0
    %s17 = scalar_lea.sflag [#allocation6], 1
    %18 = vsyncpa %s17, 0
    %19 = vsyncpa [#allocation9], 0
    %s20 = scalar_lea.sflag [#allocation9], 1
    %21 = vsyncpa %s20, 0
    %22 = vsyncpa [#allocation12], 0
    %s23 = scalar_lea.sflag [#allocation12], 1
    %24 = vsyncpa %s23, 0
    %25 = vsyncpa [#allocation4], 0
    %s26 = scalar_lea.sflag [#allocation4], 1
    %27 = vsyncpa %s26, 0
    %28 = vsyncpa [#allocation15], 0
    %s29 = scalar_lea.sflag [#allocation15], 1
    %30 = vsyncpa %s29, 0
    loop: start=0, step=1, limit=4
    $region2: #{tpu_custom_call.1} parent=1 // loop_pre_header
      _
    $region3: #{tpu_custom_call.1} parent=1 // loop_header
      %s32 = sphi 0, %s36
      %p33 = scmp.ge.s32.totalorder %s32, 4
      %s39 = sphi 0, %s51
      %s40 = sphi 0, %s47
      %s41 = sphi 0, %s39
      %s42 = sphi 0, %s40
      %s43 = sphi 0, %s41
      %s44 = sphi 0, %s42
      %s56 = sphi 0, %s58
      %s59 = sphi 0, %s56
      %s60 = sphi 0, %s59
      %s76 = sphi 0, %s60
      %s84 = sphi 0, %s86
      %s87 = sphi 0, %s84
      %s88 = sphi 0, %s87
      %s104 = sphi 0, %s88
      %s112 = sphi 0, %s114
      %s115 = sphi 0, %s112
      %s116 = sphi 0, %s115
      %s132 = sphi 0, %s116
      %s140 = sphi 0, %s142
      %s143 = sphi 0, %s140
      %s144 = sphi 0, %s143
      %s160 = sphi 0, %s144
      %s168 = sphi 0, %s170
      %s171 = sphi 0, %s168
      %s172 = sphi 0, %s171
      %s188 = sphi 0, %s172
      %s196 = sphi 0, %s198
      %s199 = sphi 0, %s196
      %s200 = sphi 0, %s199
      %s216 = sphi 0, %s200
      %s224 = sphi 0, %s226
      %s227 = sphi 0, %s224
      %s228 = sphi 0, %s227
      %s244 = sphi 0, %s228
      %s252 = sphi 0, %s254
      %s255 = sphi 0, %s252
      %s256 = sphi 0, %s255
      %s272 = sphi 0, %s256
    $region4: #{tpu_custom_call.1} parent=1 // loop_header_branch
      %35 = sbr.rel (%p33) target = $region8
    $region5: #{tpu_custom_call.1} parent=1 // loop_body
      %s37 = ssub.s32 %s32, 1
      %s38 = ssub.s32 %s32, 2
      %s45 = sadd.s32 1, %s40
      %p46 = scmp.ge.s32.totalorder %s45, 1
      %s47 = scalar_select %p46, 0, %s45
      %s48 = sadd.s32 1, %s39
      %s49 = scalar_select %p46, %s48, %s39
      %p50 = scmp.ge.s32.totalorder %s49, 2
      %s51 = scalar_select %p50, 0, %s49
      %s52 = ssub.s32 %s39, %s51
      %s53 = ssub.s32 %s40, %s47
      %s54 = sor.u32 %s52, %s53
      %p55 = scmp.eq.s32.totalorder %s54, 0
      %s57 = sadd.s32 %s56, 1
      %s58 = scalar_select %p55, %s56, %s57
      %p61 = pneg %p55
      %p62 = scmp.eq.s32.totalorder %s32, 1
      %p63 = por %p61, %p62
      %p64 = scmp.ne.s32.totalorder %s56, %s59
      %p65 = scmp.eq.s32.totalorder %s32, 0
      %p66 = por %p64, %p65
      %p67 = scmp.ne.s32.totalorder %s56, %s59
      %p68 = scmp.eq.s32.totalorder %s37, 1
      %p69 = por %p67, %p68
      %p70 = scmp.ne.s32.totalorder %s59, %s60
      %p71 = scmp.eq.s32.totalorder %s37, 0
      %p72 = por %p70, %p71
      %p73 = scmp.ne.s32.totalorder %s59, %s60
      %p74 = scmp.eq.s32.totalorder %s38, 1
      %p75 = por %p73, %p74
      %p77 = scmp.ne.s32.totalorder %s60, %s76
      %p78 = scmp.eq.s32.totalorder %s38, 0
      %p79 = por %p77, %p78
      %s80 = ssub.s32 %s39, %s51
      %s81 = ssub.s32 %s40, %s47
      %s82 = sor.u32 %s80, %s81
      %p83 = scmp.eq.s32.totalorder %s82, 0
      %s85 = sadd.s32 %s84, 1
      %s86 = scalar_select %p83, %s84, %s85
      %p89 = pneg %p83
      %p90 = scmp.eq.s32.totalorder %s32, 1
      %p91 = por %p89, %p90
      %p92 = scmp.ne.s32.totalorder %s84, %s87
      %p93 = scmp.eq.s32.totalorder %s32, 0
      %p94 = por %p92, %p93
      %p95 = scmp.ne.s32.totalorder %s84, %s87
      %p96 = scmp.eq.s32.totalorder %s37, 1
      %p97 = por %p95, %p96
      %p98 = scmp.ne.s32.totalorder %s87, %s88
      %p99 = scmp.eq.s32.totalorder %s37, 0
      %p100 = por %p98, %p99
      %p101 = scmp.ne.s32.totalorder %s87, %s88
      %p102 = scmp.eq.s32.totalorder %s38, 1
      %p103 = por %p101, %p102
      %p105 = scmp.ne.s32.totalorder %s88, %s104
      %p106 = scmp.eq.s32.totalorder %s38, 0
      %p107 = por %p105, %p106
      %s108 = ssub.s32 %s39, %s51
      %s109 = ssub.s32 %s40, %s47
      %s110 = sor.u32 %s108, %s109
      %p111 = scmp.eq.s32.totalorder %s110, 0
      %s113 = sadd.s32 %s112, 1
      %s114 = scalar_select %p111, %s112, %s113
      %p117 = pneg %p111
      %p118 = scmp.eq.s32.totalorder %s32, 1
      %p119 = por %p117, %p118
      %p120 = scmp.ne.s32.totalorder %s112, %s115
      %p121 = scmp.eq.s32.totalorder %s32, 0
      %p122 = por %p120, %p121
      %p123 = scmp.ne.s32.totalorder %s112, %s115
      %p124 = scmp.eq.s32.totalorder %s37, 1
      %p125 = por %p123, %p124
      %p126 = scmp.ne.s32.totalorder %s115, %s116
      %p127 = scmp.eq.s32.totalorder %s37, 0
      %p128 = por %p126, %p127
      %p129 = scmp.ne.s32.totalorder %s115, %s116
      %p130 = scmp.eq.s32.totalorder %s38, 1
      %p131 = por %p129, %p130
      %p133 = scmp.ne.s32.totalorder %s116, %s132
      %p134 = scmp.eq.s32.totalorder %s38, 0
      %p135 = por %p133, %p134
      %s136 = ssub.s32 %s39, %s51
      %s137 = ssub.s32 %s40, %s47
      %s138 = sor.u32 %s136, %s137
      %p139 = scmp.eq.s32.totalorder %s138, 0
      %s141 = sadd.s32 %s140, 1
      %s142 = scalar_select %p139, %s140, %s141
      %p145 = pneg %p139
      %p146 = scmp.eq.s32.totalorder %s32, 1
      %p147 = por %p145, %p146
      %p148 = scmp.ne.s32.totalorder %s140, %s143
      %p149 = scmp.eq.s32.totalorder %s32, 0
      %p150 = por %p148, %p149
      %p151 = scmp.ne.s32.totalorder %s140, %s143
      %p152 = scmp.eq.s32.totalorder %s37, 1
      %p153 = por %p151, %p152
      %p154 = scmp.ne.s32.totalorder %s143, %s144
      %p155 = scmp.eq.s32.totalorder %s37, 0
      %p156 = por %p154, %p155
      %p157 = scmp.ne.s32.totalorder %s143, %s144
      %p158 = scmp.eq.s32.totalorder %s38, 1
      %p159 = por %p157, %p158
      %p161 = scmp.ne.s32.totalorder %s144, %s160
      %p162 = scmp.eq.s32.totalorder %s38, 0
      %p163 = por %p161, %p162
      %s164 = ssub.s32 %s39, %s51
      %s165 = ssub.s32 %s40, %s47
      %s166 = sor.u32 %s164, %s165
      %p167 = scmp.eq.s32.totalorder %s166, 0
      %s169 = sadd.s32 %s168, 1
      %s170 = scalar_select %p167, %s168, %s169
      %p173 = pneg %p167
      %p174 = scmp.eq.s32.totalorder %s32, 1
      %p175 = por %p173, %p174
      %p176 = scmp.ne.s32.totalorder %s168, %s171
      %p177 = scmp.eq.s32.totalorder %s32, 0
      %p178 = por %p176, %p177
      %p179 = scmp.ne.s32.totalorder %s168, %s171
      %p180 = scmp.eq.s32.totalorder %s37, 1
      %p181 = por %p179, %p180
      %p182 = scmp.ne.s32.totalorder %s171, %s172
      %p183 = scmp.eq.s32.totalorder %s37, 0
      %p184 = por %p182, %p183
      %p185 = scmp.ne.s32.totalorder %s171, %s172
      %p186 = scmp.eq.s32.totalorder %s38, 1
      %p187 = por %p185, %p186
      %p189 = scmp.ne.s32.totalorder %s172, %s188
      %p190 = scmp.eq.s32.totalorder %s38, 0
      %p191 = por %p189, %p190
      %s192 = ssub.s32 %s39, %s51
      %s193 = ssub.s32 %s40, %s47
      %s194 = sor.u32 %s192, %s193
      %p195 = scmp.eq.s32.totalorder %s194, 0
      %s197 = sadd.s32 %s196, 1
      %s198 = scalar_select %p195, %s196, %s197
      %p201 = pneg %p195
      %p202 = scmp.eq.s32.totalorder %s32, 1
      %p203 = por %p201, %p202
      %p204 = scmp.ne.s32.totalorder %s196, %s199
      %p205 = scmp.eq.s32.totalorder %s32, 0
      %p206 = por %p204, %p205
      %p207 = scmp.ne.s32.totalorder %s196, %s199
      %p208 = scmp.eq.s32.totalorder %s37, 1
      %p209 = por %p207, %p208
      %p210 = scmp.ne.s32.totalorder %s199, %s200
      %p211 = scmp.eq.s32.totalorder %s37, 0
      %p212 = por %p210, %p211
      %p213 = scmp.ne.s32.totalorder %s199, %s200
      %p214 = scmp.eq.s32.totalorder %s38, 1
      %p215 = por %p213, %p214
      %p217 = scmp.ne.s32.totalorder %s200, %s216
      %p218 = scmp.eq.s32.totalorder %s38, 0
      %p219 = por %p217, %p218
      %s220 = ssub.s32 %s39, %s51
      %s221 = ssub.s32 %s40, %s47
      %s222 = sor.u32 %s220, %s221
      %p223 = scmp.eq.s32.totalorder %s222, 0
      %s225 = sadd.s32 %s224, 1
      %s226 = scalar_select %p223, %s224, %s225
      %p229 = pneg %p223
      %p230 = scmp.eq.s32.totalorder %s32, 1
      %p231 = por %p229, %p230
      %p232 = scmp.ne.s32.totalorder %s224, %s227
      %p233 = scmp.eq.s32.totalorder %s32, 0
      %p234 = por %p232, %p233
      %p235 = scmp.ne.s32.totalorder %s224, %s227
      %p236 = scmp.eq.s32.totalorder %s37, 1
      %p237 = por %p235, %p236
      %p238 = scmp.ne.s32.totalorder %s227, %s228
      %p239 = scmp.eq.s32.totalorder %s37, 0
      %p240 = por %p238, %p239
      %p241 = scmp.ne.s32.totalorder %s227, %s228
      %p242 = scmp.eq.s32.totalorder %s38, 1
      %p243 = por %p241, %p242
      %p245 = scmp.ne.s32.totalorder %s228, %s244
      %p246 = scmp.eq.s32.totalorder %s38, 0
      %p247 = por %p245, %p246
      %s248 = ssub.s32 %s39, %s51
      %s249 = ssub.s32 %s40, %s47
      %s250 = sor.u32 %s248, %s249
      %p251 = scmp.eq.s32.totalorder %s250, 0
      %s253 = sadd.s32 %s252, 1
      %s254 = scalar_select %p251, %s252, %s253
      %p257 = pneg %p251
      %p258 = scmp.eq.s32.totalorder %s32, 1
      %p259 = por %p257, %p258
      %p260 = scmp.ne.s32.totalorder %s252, %s255
      %p261 = scmp.eq.s32.totalorder %s32, 0
      %p262 = por %p260, %p261
      %p263 = scmp.ne.s32.totalorder %s252, %s255
      %p264 = scmp.eq.s32.totalorder %s37, 1
      %p265 = por %p263, %p264
      %p266 = scmp.ne.s32.totalorder %s255, %s256
      %p267 = scmp.eq.s32.totalorder %s37, 0
      %p268 = por %p266, %p267
      %p269 = scmp.ne.s32.totalorder %s255, %s256
      %p270 = scmp.eq.s32.totalorder %s38, 1
      %p271 = por %p269, %p270
      %p273 = scmp.ne.s32.totalorder %s256, %s272
      %p274 = scmp.eq.s32.totalorder %s38, 0
      %p275 = por %p273, %p274
      %p276 = scmp.le.s32.totalorder 1, %s32
      %p277 = scmp.lt.s32.totalorder %s32, 3
      %p278 = pnand %p276, %p277
      %p279 = pneg %p278
      // Predicated region
      $region9: #{tpu_custom_call.1} parent=5 // pred_check
        _
      $region10: #{tpu_custom_call.1} parent=5 // pred_check_branch
        %281 = sbr.rel (%p278) target = $region12
      $region11: #{tpu_custom_call.1} parent=5 // pred_region
        %s282 = ssub.s32 %s32, 1
      $region12: #{tpu_custom_call.1} parent=5 // pred_fallthru
        _
      %p283 = scmp.lt.s32.totalorder %s32, 2
      // Predicated region
      $region13: #{tpu_custom_call.1} parent=5 // pred_check
        %p284 = pneg %p283
      $region14: #{tpu_custom_call.1} parent=5 // pred_check_branch
        %286 = sbr.rel (%p284) target = $region16
      $region15: #{tpu_custom_call.1} parent=5 // pred_region
        // Predicated region
        $region17: #{tpu_custom_call.1} parent=15 // pred_check
          %p287 = pneg %p66
        $region18: #{tpu_custom_call.1} parent=15 // pred_check_branch
          %289 = sbr.rel (%p287) target = $region20
        $region19: #{tpu_custom_call.1} parent=15 // pred_region
          %s290 = sand.u32 %s56, 1
          %s291 = scalar_lea.sflag [#allocation3], %s290
          %s292 = sand.u32 %s56, 1
          %s293 = smul.addr %s292, 16
          %s294 = scalar_lea.vmem [#allocation2], %s293
          %s296 = ssub.s32 256, 256
          %297 = vsyncadd %s291, %s296
          %s298 = smul.addr %s39, 2
          %s299 = sadd.s32 %s40, %s298
          %s300 = smul.addr %s299, 128
          %s301 = scalar_lea.hbm %s0, %s300
          %s302 = sshll.u32 %s294, 4
          %s303 = int_to_ptr.vmem [resolvable:$true] %s302
          %308 = dma.hbm_to_vmem [thread:$0]  %s301, 256, %s303, %s291, 128, 128, 8
        $region20: #{tpu_custom_call.1} parent=15 // pred_fallthru
          _
        // Predicated region
        $region21: #{tpu_custom_call.1} parent=15 // pred_check
          %p309 = pneg %p94
        $region22: #{tpu_custom_call.1} parent=15 // pred_check_branch
          %311 = sbr.rel (%p309) target = $region24
        $region23: #{tpu_custom_call.1} parent=15 // pred_region
          %s312 = sand.u32 %s32, 1
          %s313 = scalar_lea.sflag [#allocation6], %s312
          %s314 = sand.u32 %s84, 1
          %s315 = smul.addr %s314, 8
          %s316 = scalar_lea.vmem [#allocation5], %s315
          %s318 = ssub.s32 128, 128
          %319 = vsyncadd %s313, %s318
          %s320 = sadd.s32 %s40, %s39
          %s321 = smul.addr %s320, 128
          %s322 = scalar_lea.hbm %s1, %s321
          %s324 = sshll.u32 %s316, 4
          %s325 = int_to_ptr.vmem [resolvable:$true] %s324
          %327 = dma.hbm_to_vmem [thread:$0]  %s322, 128, %s325, %s313
        $region24: #{tpu_custom_call.1} parent=15 // pred_fallthru
          _
        // Predicated region
        $region25: #{tpu_custom_call.1} parent=15 // pred_check
          %p328 = pneg %p122
        $region26: #{tpu_custom_call.1} parent=15 // pred_check_branch
          %330 = sbr.rel (%p328) target = $region28
        $region27: #{tpu_custom_call.1} parent=15 // pred_region
          %s331 = sand.u32 %s32, 1
          %s332 = scalar_lea.sflag [#allocation6], %s331
          %s333 = sand.u32 %s112, 1
          %s334 = smul.addr %s333, 32
          %s335 = scalar_lea.vmem [#allocation7], %s334
          %s337 = ssub.s32 512, 512
          %338 = vsyncadd %s332, %s337
          %s339 = smul.addr %s39, 4
          %s340 = sadd.s32 %s40, %s339
          %s341 = smul.addr %s340, 128
          %s342 = scalar_lea.hbm %s2, %s341
          %s343 = sshll.u32 %s335, 4
          %s344 = int_to_ptr.vmem [resolvable:$true] %s343
          %349 = dma.hbm_to_vmem [thread:$0]  %s342, 512, %s344, %s332, 128, 128, 8
        $region28: #{tpu_custom_call.1} parent=15 // pred_fallthru
          _
        // Predicated region
        $region29: #{tpu_custom_call.1} parent=15 // pred_check
          %p350 = pneg %p150
        $region30: #{tpu_custom_call.1} parent=15 // pred_check_branch
          %352 = sbr.rel (%p350) target = $region32
        $region31: #{tpu_custom_call.1} parent=15 // pred_region
          %s353 = sand.u32 %s32, 1
          %s354 = scalar_lea.sflag [#allocation9], %s353
          %s355 = sand.u32 %s140, 1
          %s356 = smul.addr %s355, 32
          %s357 = scalar_lea.vmem [#allocation8], %s356
          %s359 = ssub.s32 512, 512
          %360 = vsyncadd %s354, %s359
          %s361 = smul.addr %s39, 4
          %s362 = sadd.s32 %s40, %s361
          %s363 = smul.addr %s362, 128
          %s364 = scalar_lea.hbm %s3, %s363
          %s365 = sshll.u32 %s357, 4
          %s366 = int_to_ptr.vmem [resolvable:$true] %s365
          %371 = dma.hbm_to_vmem [thread:$0]  %s364, 512, %s366, %s354, 128, 128, 8
        $region32: #{tpu_custom_call.1} parent=15 // pred_fallthru
          _
        // Predicated region
        $region33: #{tpu_custom_call.1} parent=15 // pred_check
          %p372 = pneg %p178
        $region34: #{tpu_custom_call.1} parent=15 // pred_check_branch
          %374 = sbr.rel (%p372) target = $region36
        $region35: #{tpu_custom_call.1} parent=15 // pred_region
          %s375 = sand.u32 %s32, 1
          %s376 = scalar_lea.sflag [#allocation9], %s375
          %s377 = sand.u32 %s168, 1
          %s378 = smul.addr %s377, 8
          %s379 = scalar_lea.vmem [#allocation10], %s378
          %s381 = ssub.s32 128, 128
          %382 = vsyncadd %s376, %s381
          %s383 = sadd.s32 %s40, %s39
          %s384 = smul.addr %s383, 128
          %s385 = scalar_lea.hbm %s4, %s384
          %s387 = sshll.u32 %s379, 4
          %s388 = int_to_ptr.vmem [resolvable:$true] %s387
          %390 = dma.hbm_to_vmem [thread:$0]  %s385, 128, %s388, %s376
        $region36: #{tpu_custom_call.1} parent=15 // pred_fallthru
          _
        // Predicated region
        $region37: #{tpu_custom_call.1} parent=15 // pred_check
          %p391 = pneg %p206
        $region38: #{tpu_custom_call.1} parent=15 // pred_check_branch
          %393 = sbr.rel (%p391) target = $region40
        $region39: #{tpu_custom_call.1} parent=15 // pred_region
          %s394 = sand.u32 %s196, 1
          %s395 = scalar_lea.sflag [#allocation12], %s394
          %s396 = sand.u32 %s196, 1
          %s397 = smul.addr %s396, 32
          %s398 = scalar_lea.vmem [#allocation11], %s397
          %s400 = ssub.s32 512, 512
          %401 = vsyncadd %s395, %s400
          %s402 = smul.addr %s39, 4
          %s403 = sadd.s32 %s40, %s402
          %s404 = smul.addr %s403, 128
          %s405 = scalar_lea.hbm %s5, %s404
          %s406 = sshll.u32 %s398, 4
          %s407 = int_to_ptr.vmem [resolvable:$true] %s406
          %412 = dma.hbm_to_vmem [thread:$0]  %s405, 512, %s407, %s395, 128, 128, 8
        $region40: #{tpu_custom_call.1} parent=15 // pred_fallthru
          _
      $region16: #{tpu_custom_call.1} parent=5 // pred_fallthru
        _
      %p413 = scmp.le.s32.totalorder 1, %s32
      %p414 = scmp.lt.s32.totalorder %s32, 3
      %p415 = pnand %p413, %p414
      %p416 = pneg %p415
      // Predicated region
      $region41: #{tpu_custom_call.1} parent=5 // pred_check
        _
      $region42: #{tpu_custom_call.1} parent=5 // pred_check_branch
        %418 = sbr.rel (%p415) target = $region44
      $region43: #{tpu_custom_call.1} parent=5 // pred_region
        %s419 = ssub.s32 %s32, 1
        %s420 = sand.u32 %s59, 1
        %s421 = scalar_lea.sflag [#allocation3], %s420
        %s422 = sand.u32 %s59, 1
        %s423 = smul.addr %s422, 16
        %s424 = scalar_lea.vmem [#allocation2], %s423
        // Predicated region
        $region45: #{tpu_custom_call.1} parent=43 // pred_check
          %p425 = pneg %p72
        $region46: #{tpu_custom_call.1} parent=43 // pred_check_branch
          %427 = sbr.rel (%p425) target = $region48
        $region47: #{tpu_custom_call.1} parent=43 // pred_region
          %428 = dma.done %s421, 256
        $region48: #{tpu_custom_call.1} parent=43 // pred_fallthru
          _
        %s429 = sand.u32 %s37, 1
        %s430 = scalar_lea.sflag [#allocation6], %s429
        %s431 = sand.u32 %s87, 1
        %s432 = smul.addr %s431, 8
        %s433 = scalar_lea.vmem [#allocation5], %s432
        // Predicated region
        $region49: #{tpu_custom_call.1} parent=43 // pred_check
          %p434 = pneg %p100
        $region50: #{tpu_custom_call.1} parent=43 // pred_check_branch
          %436 = sbr.rel (%p434) target = $region52
        $region51: #{tpu_custom_call.1} parent=43 // pred_region
          %437 = dma.done %s430, 128
        $region52: #{tpu_custom_call.1} parent=43 // pred_fallthru
          _
        %s438 = sand.u32 %s37, 1
        %s439 = scalar_lea.sflag [#allocation6], %s438
        %s440 = sand.u32 %s115, 1
        %s441 = smul.addr %s440, 32
        %s442 = scalar_lea.vmem [#allocation7], %s441
        // Predicated region
        $region53: #{tpu_custom_call.1} parent=43 // pred_check
          %p443 = pneg %p128
        $region54: #{tpu_custom_call.1} parent=43 // pred_check_branch
          %445 = sbr.rel (%p443) target = $region56
        $region55: #{tpu_custom_call.1} parent=43 // pred_region
          %446 = dma.done %s439, 512
        $region56: #{tpu_custom_call.1} parent=43 // pred_fallthru
          _
        %s447 = sand.u32 %s37, 1
        %s448 = scalar_lea.sflag [#allocation9], %s447
        %s449 = sand.u32 %s143, 1
        %s450 = smul.addr %s449, 32
        %s451 = scalar_lea.vmem [#allocation8], %s450
        // Predicated region
        $region57: #{tpu_custom_call.1} parent=43 // pred_check
          %p452 = pneg %p156
        $region58: #{tpu_custom_call.1} parent=43 // pred_check_branch
          %454 = sbr.rel (%p452) target = $region60
        $region59: #{tpu_custom_call.1} parent=43 // pred_region
          %455 = dma.done %s448, 512
        $region60: #{tpu_custom_call.1} parent=43 // pred_fallthru
          _
        %s456 = sand.u32 %s37, 1
        %s457 = scalar_lea.sflag [#allocation9], %s456
        %s458 = sand.u32 %s171, 1
        %s459 = smul.addr %s458, 8
        %s460 = scalar_lea.vmem [#allocation10], %s459
        // Predicated region
        $region61: #{tpu_custom_call.1} parent=43 // pred_check
          %p461 = pneg %p184
        $region62: #{tpu_custom_call.1} parent=43 // pred_check_branch
          %463 = sbr.rel (%p461) target = $region64
        $region63: #{tpu_custom_call.1} parent=43 // pred_region
          %464 = dma.done %s457, 128
        $region64: #{tpu_custom_call.1} parent=43 // pred_fallthru
          _
        %s465 = sand.u32 %s199, 1
        %s466 = scalar_lea.sflag [#allocation12], %s465
        %s467 = sand.u32 %s199, 1
        %s468 = smul.addr %s467, 32
        %s469 = scalar_lea.vmem [#allocation11], %s468
        // Predicated region
        $region65: #{tpu_custom_call.1} parent=43 // pred_check
          %p470 = pneg %p212
        $region66: #{tpu_custom_call.1} parent=43 // pred_check_branch
          %472 = sbr.rel (%p470) target = $region68
        $region67: #{tpu_custom_call.1} parent=43 // pred_region
          %473 = dma.done %s466, 512
        $region68: #{tpu_custom_call.1} parent=43 // pred_fallthru
          _
        %s474 = sand.u32 %s59, 1
        %s475 = scalar_lea.sflag [#allocation3], %s474
        %s476 = sand.u32 %s59, 1
        %s477 = smul.addr %s476, 16
        %s478 = scalar_lea.vmem [#allocation2], %s477
        %p479 = pneg %p72
        %p480 = pneg %p69
        %s481 = sand.u32 %s37, 1
        %s482 = scalar_lea.sflag [#allocation6], %s481
        %s483 = sand.u32 %s87, 1
        %s484 = smul.addr %s483, 8
        %s485 = scalar_lea.vmem [#allocation5], %s484
        %p486 = pneg %p100
        %p487 = pneg %p97
        %s488 = sand.u32 %s37, 1
        %s489 = scalar_lea.sflag [#allocation6], %s488
        %s490 = sand.u32 %s115, 1
        %s491 = smul.addr %s490, 32
        %s492 = scalar_lea.vmem [#allocation7], %s491
        %p493 = pneg %p128
        %p494 = pneg %p125
        %s495 = sand.u32 %s37, 1
        %s496 = scalar_lea.sflag [#allocation9], %s495
        %s497 = sand.u32 %s143, 1
        %s498 = smul.addr %s497, 32
        %s499 = scalar_lea.vmem [#allocation8], %s498
        %p500 = pneg %p156
        %p501 = pneg %p153
        %s502 = sand.u32 %s37, 1
        %s503 = scalar_lea.sflag [#allocation9], %s502
        %s504 = sand.u32 %s171, 1
        %s505 = smul.addr %s504, 8
        %s506 = scalar_lea.vmem [#allocation10], %s505
        %p507 = pneg %p184
        %p508 = pneg %p181
        %s509 = sand.u32 %s199, 1
        %s510 = scalar_lea.sflag [#allocation12], %s509
        %s511 = sand.u32 %s199, 1
        %s512 = smul.addr %s511, 32
        %s513 = scalar_lea.vmem [#allocation11], %s512
        %p514 = pneg %p212
        %p515 = pneg %p209
        %p516 = pneg %p240
        %p517 = pneg %p237
        %s518 = sand.u32 %s227, 1
        %s519 = scalar_lea.sflag [#allocation4], %s518
        %s520 = sand.u32 %s227, 1
        %s521 = smul.addr %s520, 32
        %s522 = scalar_lea.vmem [#allocation13], %s521
        %p523 = pneg %p268
        %p524 = pneg %p265
        %s525 = sand.u32 %s255, 1
        %s526 = scalar_lea.sflag [#allocation15], %s525
        %s527 = sand.u32 %s255, 1
        %s528 = smul.addr %s527, 8
        %s529 = scalar_lea.vmem [#allocation14], %s528
        %v530 = vld [vmem:[%s424] sm:$0xff]
        %v531 = vld [vmem:[%s424 + $0x8] sm:$0xff]
        %v532 = vld [vmem:[%s442] sm:$0xff]
        %v533 = vld [vmem:[%s442 + $0x8] sm:$0xff]
        %v534 = vld [vmem:[%s442 + $0x10] sm:$0xff]
        %v535 = vld [vmem:[%s442 + $0x18] sm:$0xff]
        %v536 = vld [vmem:[%s451] sm:$0xff]
        %v537 = vld [vmem:[%s451 + $0x8] sm:$0xff]
        %v538 = vld [vmem:[%s451 + $0x10] sm:$0xff]
        %v539 = vld [vmem:[%s451 + $0x18] sm:$0xff]
        %v540 = vld [vmem:[%s469] sm:$0xff]
        %v541 = vld [vmem:[%s469 + $0x8] sm:$0xff]
        %v542 = vld [vmem:[%s469 + $0x10] sm:$0xff]
        %v543 = vld [vmem:[%s469 + $0x18] sm:$0xff]
        %v544 = vld [vmem:[%s433] sm:$0xff]
        %v545 = vld [vmem:[%s460] sm:$0xff]
        %v546 = vsub.f32 %v530, %v531
        %v547 = vand.u32 2147483647, %v546
        %v548 = vsub.f32 0.0, %v547
        %v549 = vmul.f32 %v548, 1.442695
        %v550 = vpow.pop %v549
        %v551 = vadd.f32 %v550, 1.0
        %v552 = vlog2.pop %v551
        %v553 = vmul.f32 %v552, 0.6931472
        %v554 = vmax.f32 %v546, 0.0
        %v555 = vadd.f32 %v554, %v553
        %v556 = vsub.f32 0.0, %v555
        %v557 = vsub.f32 0.0, %v546
        %v558 = vmax.f32 %v557, 0.0
        %v559 = vadd.f32 %v558, %v553
        %v560 = vsub.f32 0.0, %v559
        %vm561 = vcmp.eq.f32.partialorder %v544, 1.0
        %v562 = vsel %vm561, 1, 0
        %v563 = vcvt.s32.f32 %v562
        %vm564 = vcmp.eq.f32.partialorder %v544, 0.0
        %v565 = vsel %vm564, 1, 0
        %v566 = vcvt.s32.f32 %v565
        %v567 = vsub.f32 %v532, %v536
        %v568 = vand.u32 2147483647, %v567
        %v569 = vsub.f32 %v533, %v537
        %v570 = vand.u32 2147483647, %v569
        %v571 = vadd.f32 %v568, %v570
        %v572 = vsub.f32 %v534, %v538
        %v573 = vand.u32 2147483647, %v572
        %v574 = vadd.f32 %v571, %v573
        %v575 = vsub.f32 %v535, %v539
        %v576 = vand.u32 2147483647, %v575
        %v577 = vadd.f32 %v574, %v576
        %v578 = vmul.f32 %v577, %v545
        %v579 = vmul.f32 %v532, %v542
        %v580 = vadd.f32 %v579, %v540
        %v581 = vmul.f32 %v533, %v543
        %v582 = vadd.f32 %v581, %v541
        %v583 = vmul.f32 %v534, 1.442695
        %v584 = vpow.pop %v583
        %v585 = vmul.f32 %v584, %v542
        %v586 = vmul.f32 %v535, 1.442695
        %v587 = vpow.pop %v586
        %v588 = vmul.f32 %v587, %v543
        %v589 = vmul.f32 %v585, 0.5
        %v590 = vsub.f32 %v580, %v589
        %v591 = vmul.f32 %v588, 0.5
        %v592 = vsub.f32 %v582, %v591
        %v593 = vadd.f32 %v580, %v589
        %v594 = vadd.f32 %v582, %v591
        %595 = vst [vmem:[%s522] sm:$0xff] %v590
        %596 = vst [vmem:[%s522 + $0x8] sm:$0xff] %v592
        %597 = vst [vmem:[%s522 + $0x10] sm:$0xff] %v593
        %598 = vst [vmem:[%s522 + $0x18] sm:$0xff] %v594
        %v599 = vsub.f32 0.0, %v556
        %v600 = vmul.f32 %v599, %v563
        %v601 = vrot.slane %v600, 4
        %v602 = vadd.f32 %v600, %v601
        %v603 = vrot.slane %v602, 2
        %v604 = vadd.f32 %v602, %v603
        %v605 = vrot.slane %v604, 1
        %v606 = vadd.f32 %v604, %v605
        %v607 = vrot.slane %v563, 4
        %v608 = vadd.f32 %v563, %v607
        %v609 = vrot.slane %v608, 2
        %v610 = vadd.f32 %v608, %v609
        %v611 = vrot.slane %v610, 1
        %v612 = vadd.f32 %v610, %v611
        %v613 = vsub.f32 0.0, %v560
        %v614 = vmul.f32 %v613, %v566
        %v615 = vrot.slane %v614, 4
        %v616 = vadd.f32 %v614, %v615
        %v617 = vrot.slane %v616, 2
        %v618 = vadd.f32 %v616, %v617
        %v619 = vrot.slane %v618, 1
        %v620 = vadd.f32 %v618, %v619
        %v621 = vrot.slane %v566, 4
        %v622 = vadd.f32 %v566, %v621
        %v623 = vrot.slane %v622, 2
        %v624 = vadd.f32 %v622, %v623
        %v625 = vrot.slane %v624, 1
        %v626 = vadd.f32 %v624, %v625
        %v627 = vrot.slane %v578, 4
        %v628 = vadd.f32 %v578, %v627
        %v629 = vrot.slane %v628, 2
        %v630 = vadd.f32 %v628, %v629
        %v631 = vrot.slane %v630, 1
        %v632 = vadd.f32 %v630, %v631
        %vm633 = vcmask 1040384
        %v634 = vsel %vm633, %v606, %v612
        %vm635 = vcmask 1041408
        %v636 = vsel %vm635, %v634, %v620
        %vm637 = vcmask 1042432
        %v638 = vsel %vm637, %v636, %v626
        %vm639 = vcmask 1043456
        %v640 = vsel %vm639, %v638, %v632
        %vm641 = vcmask 1044480
        %v642 = vsel %vm641, %v640, 0.0
        %643 = vst [vmem:[%s529] sm:$0xff] %v642
        %s644 = sand.u32 %s227, 1
        %s645 = scalar_lea.sflag [#allocation4], %s644
        %s646 = sand.u32 %s227, 1
        %s647 = smul.addr %s646, 32
        %s648 = scalar_lea.vmem [#allocation13], %s647
        %s649 = sand.u32 %s255, 1
        %s650 = scalar_lea.sflag [#allocation15], %s649
        %s651 = sand.u32 %s255, 1
        %s652 = smul.addr %s651, 8
        %s653 = scalar_lea.vmem [#allocation14], %s652
        // Predicated region
        $region69: #{tpu_custom_call.1} parent=43 // pred_check
          %p654 = pneg %p237
        $region70: #{tpu_custom_call.1} parent=43 // pred_check_branch
          %656 = sbr.rel (%p654) target = $region72
        $region71: #{tpu_custom_call.1} parent=43 // pred_region
          %s658 = ssub.s32 512, 512
          %659 = vsyncadd %s645, %s658
          %s660 = smul.addr %s41, 4
          %s661 = sadd.s32 %s42, %s660
          %s662 = smul.addr %s661, 128
          %s663 = scalar_lea.hbm %s6, %s662
          %s664 = sshll.u32 %s648, 4
          %s665 = int_to_ptr.vmem [resolvable:$true] %s664
          %670 = dma.vmem_to_hbm [thread:$0]  %s665, 512, %s663, %s645, 128, 128, 8
        $region72: #{tpu_custom_call.1} parent=43 // pred_fallthru
          _
        // Predicated region
        $region73: #{tpu_custom_call.1} parent=43 // pred_check
          %p671 = pneg %p265
        $region74: #{tpu_custom_call.1} parent=43 // pred_check_branch
          %673 = sbr.rel (%p671) target = $region76
        $region75: #{tpu_custom_call.1} parent=43 // pred_region
          %s675 = ssub.s32 128, 128
          %676 = vsyncadd %s650, %s675
          %s677 = sadd.s32 %s42, %s41
          %s678 = smul.addr %s677, 128
          %s679 = scalar_lea.hbm %s7, %s678
          %s681 = sshll.u32 %s653, 4
          %s682 = int_to_ptr.vmem [resolvable:$true] %s681
          %684 = dma.vmem_to_hbm [thread:$0]  %s682, 128, %s679, %s650
        $region76: #{tpu_custom_call.1} parent=43 // pred_fallthru
          _
      $region44: #{tpu_custom_call.1} parent=5 // pred_fallthru
        _
      %p685 = scmp.le.s32.totalorder 2, %s32
      // Predicated region
      $region77: #{tpu_custom_call.1} parent=5 // pred_check
        %p686 = pneg %p685
      $region78: #{tpu_custom_call.1} parent=5 // pred_check_branch
        %688 = sbr.rel (%p686) target = $region80
      $region79: #{tpu_custom_call.1} parent=5 // pred_region
        %s689 = ssub.s32 %s32, 2
        // Predicated region
        $region81: #{tpu_custom_call.1} parent=79 // pred_check
          %p690 = pneg %p243
        $region82: #{tpu_custom_call.1} parent=79 // pred_check_branch
          %692 = sbr.rel (%p690) target = $region84
        $region83: #{tpu_custom_call.1} parent=79 // pred_region
          %s693 = sand.u32 %s228, 1
          %s694 = scalar_lea.sflag [#allocation4], %s693
          %s695 = sand.u32 %s228, 1
          %s696 = smul.addr %s695, 32
          %s697 = scalar_lea.vmem [#allocation13], %s696
          %698 = dma.done %s694, 512
        $region84: #{tpu_custom_call.1} parent=79 // pred_fallthru
          _
        // Predicated region
        $region85: #{tpu_custom_call.1} parent=79 // pred_check
          %p699 = pneg %p271
        $region86: #{tpu_custom_call.1} parent=79 // pred_check_branch
          %701 = sbr.rel (%p699) target = $region88
        $region87: #{tpu_custom_call.1} parent=79 // pred_region
          %s702 = sand.u32 %s256, 1
          %s703 = scalar_lea.sflag [#allocation15], %s702
          %s704 = sand.u32 %s256, 1
          %s705 = smul.addr %s704, 8
          %s706 = scalar_lea.vmem [#allocation14], %s705
          %707 = dma.done %s703, 128
        $region88: #{tpu_custom_call.1} parent=79 // pred_fallthru
          _
      $region80: #{tpu_custom_call.1} parent=5 // pred_fallthru
        _
    $region6: #{tpu_custom_call.1} parent=1 // loop_footer
      %s36 = sadd.s32 1, %s32
    $region7: #{tpu_custom_call.1} parent=1 // loop_footer_branch
      %31 = sbr.rel target = $region3
    $region8: #{tpu_custom_call.1} parent=1 // loop_exit
      _
    %708 = vsyncpa [#allocation3], 1
    %s709 = scalar_lea.sflag [#allocation3], 1
    %710 = vsyncpa %s709, 1
    %711 = vsyncpa [#allocation6], 1
    %s712 = scalar_lea.sflag [#allocation6], 1
    %713 = vsyncpa %s712, 1
    %714 = vsyncpa [#allocation9], 1
    %s715 = scalar_lea.sflag [#allocation9], 1
    %716 = vsyncpa %s715, 1
    %717 = vsyncpa [#allocation12], 1
    %s718 = scalar_lea.sflag [#allocation12], 1
    %719 = vsyncpa %s718, 1
    %720 = vsyncpa [#allocation4], 1
    %s721 = scalar_lea.sflag [#allocation4], 1
    %722 = vsyncpa %s721, 1
    %723 = vsyncpa [#allocation15], 1
    %s724 = scalar_lea.sflag [#allocation15], 1
    %725 = vsyncpa %s724, 1

</llo_original>
